<compile_context>
chip_gen: v7x
topology: tpu7x:2x2x1
jax: 0.10.0
libtpu: 0.0.40
codegen_flags: <defaults>
</compile_context>

<pallas_src>
import functools

import jax
import jax.numpy as jnp
import numpy as np
from jax import lax
from jax.experimental import pallas as pl
from jax.experimental.pallas import tpu as pltpu


def rnn_kernel(x_ref, w_ih_ref, w_hh_ref, b_ref, w_lin_ref, b_lin_ref,
               out_ref, state_ref, *, nonlinearity="tanh", mm_dtype=jnp.float32):
    # x_ref:    (T, TB, C)   seq-major input block
    # state_ref:(T, TB, H)   VMEM scratch; first holds x@W_ih+b, then is overwritten with h_t
    # out_ref:  (T, TB, O)
    T, TB, C = x_ref.shape
    H = w_hh_ref.shape[0]
    O = w_lin_ref.shape[1]

    act = jnp.tanh if nonlinearity == "tanh" else (lambda v: jnp.maximum(v, 0.0))

    # --- (1) Hoisted input projection: one (T*TB, C) @ (C, H) matmul for all timesteps. ---
    x2 = x_ref[...].reshape(T * TB, C)
    w_ih = w_ih_ref[...]
    if mm_dtype != x2.dtype:
        x2 = x2.astype(mm_dtype)
        w_ih = w_ih.astype(mm_dtype)
    xw = jnp.dot(x2, w_ih, preferred_element_type=jnp.float32) + b_ref[...]  # b = b_ih + b_hh
    state_ref[...] = xw.reshape(T, TB, H)          # stage seq-major in VMEM scratch

    # --- (2) Serial recurrence: h carried in vregs; state_ref[t] is a contiguous
    #         leading-axis slab, read then overwritten in place with h_t. ---
    # TODO(synk): w_hh could be staged in the MXU once across all steps via
    # pltpu.matmul_push_rhs / matmul_acc_lhs / matmul_pop to drop the per-step weight push.
    w_hh = w_hh_ref[...]

    def step(t, h):
        h_new = act(state_ref[t] +
                    jnp.dot(h, w_hh, preferred_element_type=jnp.float32))
        state_ref[t] = h_new
        return h_new

    h0 = jnp.zeros((TB, H), jnp.float32)           # PyTorch default h0 = 0
    lax.fori_loop(0, T, step, h0, unroll=min(T, 8))

    # --- (3) Deferred output Linear: one (T*TB, H) @ (H, O) matmul, one store. ---
    hidden = state_ref[...].reshape(T * TB, H)
    w_lin = w_lin_ref[...]
    if mm_dtype != hidden.dtype:
        hidden = hidden.astype(mm_dtype)
        w_lin = w_lin.astype(mm_dtype)
    out = jnp.dot(hidden, w_lin, preferred_element_type=jnp.float32) + b_lin_ref[...]
    out_ref[...] = out.reshape(T, TB, O).astype(out_ref.dtype)


def rnn_forward(x, params, *, nonlinearity="tanh", batch_tile=None, use_bf16_matmuls=False):
    """x: (B, T, C_in) float32, batch_first like the PyTorch module. Returns (B, T, O)."""
    B, T, C = x.shape
    H = params["w_hh"].shape[0]
    O = params["w_lin"].shape[1]

    TB = B if batch_tile is None else batch_tile
    assert B % TB == 0, "batch_tile must divide B"
    # Batch is the sublane dim of the seq-major blocks: tile must be the full batch or 8-aligned.
    assert TB == B or TB % 8 == 0, "batch_tile must equal B or be a multiple of 8"
    num_tiles = B // TB

    # Pre-fuse the two recurrent biases (always summed inside the RNN cell).
    b_fused = params["b_ih"] + params["b_hh"]                      # (1, H)

    # Seq-major layout so the per-step slice inside the kernel is a leading-axis view.
    x_seq = jnp.transpose(x, (1, 0, 2))                            # (T, B, C)

    mm_dtype = jnp.bfloat16 if use_bf16_matmuls else jnp.float32
    kernel = functools.partial(rnn_kernel, nonlinearity=nonlinearity, mm_dtype=mm_dtype)

    # VMEM budget: double-buffered blocks/weights + scratch + matmul temps (f32 bytes),
    # floored at 16 MiB, capped at 48 MiB so it stays within v7x's 64 MiB physical VMEM.
    f = 4
    est = (2 * (T * TB * C + T * TB * O + C * H + H * H + H + H * O + O)
           + 4 * (T * TB * H)) * f
    vmem_limit = min(48 * 1024 * 1024, max(16 * 1024 * 1024, 2 * est))

    out_seq = pl.pallas_call(
        kernel,
        out_shape=jax.ShapeDtypeStruct((T, B, O), jnp.float32),
        grid=(num_tiles,),
        in_specs=[
            pl.BlockSpec((T, TB, C), lambda i: (0, i, 0)),   # x, tiled over batch
            pl.BlockSpec((C, H), lambda i: (0, 0)),          # w_ih (resident, not re-fetched)
            pl.BlockSpec((H, H), lambda i: (0, 0)),          # w_hh
            pl.BlockSpec((1, H), lambda i: (0, 0)),          # b_ih + b_hh
            pl.BlockSpec((H, O), lambda i: (0, 0)),          # w_lin
            pl.BlockSpec((1, O), lambda i: (0, 0)),          # b_lin
        ],
        out_specs=pl.BlockSpec((T, TB, O), lambda i: (0, i, 0)),
        scratch_shapes=[pltpu.VMEM((T, TB, H), jnp.float32)],
        compiler_params=pltpu.CompilerParams(
            dimension_semantics=("parallel",),               # independent per batch tile (v7x 2 TCs)
            vmem_limit_bytes=vmem_limit,
        ),
    )(x_seq, params["w_ih"], params["w_hh"], b_fused, params["w_lin"], params["b_lin"])

    return jnp.transpose(out_seq, (1, 0, 2))                       # back to batch_first (B, T, O)


def init_params(key, in_channels, hidden_channels, out_channels):
    """Deterministic init mirroring nn.RNN / nn.Linear parameter shapes (num_layers=1).
    Weights are stored pre-transposed for the x @ W layout."""
    H = hidden_channels
    k = 1.0 / np.sqrt(H)
    keys = jax.random.split(key, 6)

    def u(kk, shape):
        return jax.random.uniform(kk, shape, jnp.float32, -k, k)

    return {
        "w_ih": u(keys[0], (in_channels, H)),       # == weight_ih_l0.T
        "w_hh": u(keys[1], (H, H)),                 # == weight_hh_l0.T
        "b_ih": u(keys[2], (1, H)),
        "b_hh": u(keys[3], (1, H)),
        "w_lin": u(keys[4], (H, out_channels)),     # == linear.weight.T
        "b_lin": u(keys[5], (1, out_channels)),
    }


def rnn_reference(x, params, nonlinearity="tanh"):
    """Pure-JAX reference reproducing torch.nn.RNN (1 layer, batch_first) + Linear."""
    act = jnp.tanh if nonlinearity == "tanh" else (lambda v: jnp.maximum(v, 0.0))
    B, T, C = x.shape
    H = params["w_hh"].shape[0]

    def step(h, x_t):
        h_new = act(x_t @ params["w_ih"] + params["b_ih"]
                    + h @ params["w_hh"] + params["b_hh"])
        return h_new, h_new

    h0 = jnp.zeros((B, H), jnp.float32)
    _, hs = lax.scan(step, h0, jnp.transpose(x, (1, 0, 2)))   # (T, B, H)
    hidden = jnp.transpose(hs, (1, 0, 2))                     # (B, T, H)
    return hidden @ params["w_lin"] + params["b_lin"]


if __name__ == "__main__":
    # Module config: RNN(in_channels=4, hidden_channels=32, out_channels=8,
    #                    num_layers=1, nonlinearity='tanh', bias=True, dropout=0)
    B, T, C_IN, H, O = 2, 8, 4, 32, 8

    key = jax.random.PRNGKey(0)
    k_x, k_p = jax.random.split(key)
    x = jax.random.normal(k_x, (B, T, C_IN), jnp.float32)
    params = init_params(k_p, C_IN, H, O)

    out = jax.block_until_ready(rnn_forward(x, params))
    ref = jax.block_until_ready(rnn_reference(x, params))

    np.testing.assert_allclose(np.asarray(out), np.asarray(ref),
                               rtol=1e-4, atol=1e-5)
    print("KERNEL_OK")
</pallas_src>

<mosaic_0001>
module attributes {stable_mosaic.version = 11 : i64} {
  func.func @rnn_kernel(%arg0: i32, %arg1: memref<8x2x4xf32, #tpu.memory_space<vmem>>, %arg2: memref<4x32xf32, #tpu.memory_space<vmem>>, %arg3: memref<32x32xf32, #tpu.memory_space<vmem>>, %arg4: memref<1x32xf32, #tpu.memory_space<vmem>>, %arg5: memref<32x8xf32, #tpu.memory_space<vmem>>, %arg6: memref<1x8xf32, #tpu.memory_space<vmem>>, %arg7: memref<8x2x8xf32, #tpu.memory_space<vmem>>, %arg8: memref<8x2x32xf32, #tpu.memory_space<vmem>>) attributes {dimension_semantics = [#tpu.dimension_semantics<parallel>], iteration_bounds = array<i64: 1>, scalar_prefetch = 0 : i64, scratch_operands = 1 : i64, tpu.core_type = #tpu.core_type<tc>, window_params = [{transform_indices = @transform_0, window_bounds = array<i64: 8, 2, 4>}, {pipeline_mode = #tpu.pipeline_mode<synchronous>, transform_indices = @transform_1, window_bounds = array<i64: 4, 32>}, {pipeline_mode = #tpu.pipeline_mode<synchronous>, transform_indices = @transform_2, window_bounds = array<i64: 32, 32>}, {pipeline_mode = #tpu.pipeline_mode<synchronous>, transform_indices = @transform_3, window_bounds = array<i64: 1, 32>}, {pipeline_mode = #tpu.pipeline_mode<synchronous>, transform_indices = @transform_4, window_bounds = array<i64: 32, 8>}, {pipeline_mode = #tpu.pipeline_mode<synchronous>, transform_indices = @transform_5, window_bounds = array<i64: 1, 8>}, {transform_indices = @transform_6, window_bounds = array<i64: 8, 2, 8>}]} {
    %c0 = arith.constant 0 : index
    %c0_0 = arith.constant 0 : index
    %c0_1 = arith.constant 0 : index
    %0 = vector.load %arg1[%c0, %c0_0, %c0_1] : memref<8x2x4xf32, #tpu.memory_space<vmem>>, vector<8x2x4xf32>
    %1 = vector.shape_cast %0 : vector<8x2x4xf32> to vector<16x4xf32>
    %c0_2 = arith.constant 0 : index
    %c0_3 = arith.constant 0 : index
    %2 = vector.load %arg2[%c0_2, %c0_3] : memref<4x32xf32, #tpu.memory_space<vmem>>, vector<4x32xf32>
    %cst = arith.constant dense<0.000000e+00> : vector<16x32xf32>
    %3 = tpu.matmul %1, %2, %cst {dimension_numbers = #tpu.dot_dimension_numbers<[1], [0], [0], [1], [0, 0, 1, 1], [], []>} : vector<16x4xf32>, vector<4x32xf32>, vector<16x32xf32> -> vector<16x32xf32>
    %c0_4 = arith.constant 0 : index
    %c0_5 = arith.constant 0 : index
    %4 = vector.load %arg4[%c0_4, %c0_5] : memref<1x32xf32, #tpu.memory_space<vmem>>, vector<1x32xf32>
    %5 = vector.broadcast %4 : vector<1x32xf32> to vector<16x32xf32>
    %6 = arith.addf %3, %5 : vector<16x32xf32>
    %7 = vector.shape_cast %6 : vector<16x32xf32> to vector<8x2x32xf32>
    %c0_6 = arith.constant 0 : index
    %c0_7 = arith.constant 0 : index
    %c0_8 = arith.constant 0 : index
    %8 = vector.load %arg8[%c0_6, %c0_7, %c0_8] : memref<8x2x32xf32, #tpu.memory_space<vmem>>, vector<8x2x32xf32>
    tpu.vector_store %arg8[%c0_6, %c0_7, %c0_8], %7 {strides = array<i32>} : memref<8x2x32xf32, #tpu.memory_space<vmem>>, vector<8x2x32xf32>,
    %c0_9 = arith.constant 0 : index
    %c0_10 = arith.constant 0 : index
    %9 = vector.load %arg3[%c0_9, %c0_10] : memref<32x32xf32, #tpu.memory_space<vmem>>, vector<32x32xf32>
    %cst_11 = arith.constant 0.000000e+00 : f32
    %10 = vector.broadcast %cst_11 : f32 to vector<2x32xf32>
    %c0_i32 = arith.constant 0 : i32
    %11 = arith.index_cast %c0_i32 : i32 to index
    %c0_12 = arith.constant 0 : index
    %c0_13 = arith.constant 0 : index
    %12 = vector.load %arg8[%11, %c0_12, %c0_13] : memref<8x2x32xf32, #tpu.memory_space<vmem>>, vector<1x2x32xf32>
    %13 = vector.shape_cast %12 : vector<1x2x32xf32> to vector<2x32xf32>
    %cst_14 = arith.constant dense<0.000000e+00> : vector<2x32xf32>
    %14 = tpu.matmul %10, %9, %cst_14 {dimension_numbers = #tpu.dot_dimension_numbers<[1], [0], [0], [1], [0, 0, 1, 1], [], []>} : vector<2x32xf32>, vector<32x32xf32>, vector<2x32xf32> -> vector<2x32xf32>
    %15 = arith.addf %13, %14 : vector<2x32xf32>
    %16 = math.tanh %15 : vector<2x32xf32>
    %17 = arith.index_cast %c0_i32 : i32 to index
    %c0_15 = arith.constant 0 : index
    %c0_16 = arith.constant 0 : index
    %18 = vector.load %arg8[%17, %c0_15, %c0_16] : memref<8x2x32xf32, #tpu.memory_space<vmem>>, vector<1x2x32xf32>
    %19 = vector.shape_cast %18 : vector<1x2x32xf32> to vector<2x32xf32>
    %20 = vector.shape_cast %16 : vector<2x32xf32> to vector<1x2x32xf32>
    tpu.vector_store %arg8[%17, %c0_15, %c0_16], %20 {strides = array<i32>} : memref<8x2x32xf32, #tpu.memory_space<vmem>>, vector<1x2x32xf32>,
    %c1_i32 = arith.constant 1 : i32
    %21 = arith.index_cast %c1_i32 : i32 to index
    %c0_17 = arith.constant 0 : index
    %c0_18 = arith.constant 0 : index
    %22 = vector.load %arg8[%21, %c0_17, %c0_18] : memref<8x2x32xf32, #tpu.memory_space<vmem>>, vector<1x2x32xf32>
    %23 = vector.shape_cast %22 : vector<1x2x32xf32> to vector<2x32xf32>
    %cst_19 = arith.constant dense<0.000000e+00> : vector<2x32xf32>
    %24 = tpu.matmul %16, %9, %cst_19 {dimension_numbers = #tpu.dot_dimension_numbers<[1], [0], [0], [1], [0, 0, 1, 1], [], []>} : vector<2x32xf32>, vector<32x32xf32>, vector<2x32xf32> -> vector<2x32xf32>
    %25 = arith.addf %23, %24 : vector<2x32xf32>
    %26 = math.tanh %25 : vector<2x32xf32>
    %27 = arith.index_cast %c1_i32 : i32 to index
    %c0_20 = arith.constant 0 : index
    %c0_21 = arith.constant 0 : index
    %28 = vector.load %arg8[%27, %c0_20, %c0_21] : memref<8x2x32xf32, #tpu.memory_space<vmem>>, vector<1x2x32xf32>
    %29 = vector.shape_cast %28 : vector<1x2x32xf32> to vector<2x32xf32>
    %30 = vector.shape_cast %26 : vector<2x32xf32> to vector<1x2x32xf32>
    tpu.vector_store %arg8[%27, %c0_20, %c0_21], %30 {strides = array<i32>} : memref<8x2x32xf32, #tpu.memory_space<vmem>>, vector<1x2x32xf32>,
    %c2_i32 = arith.constant 2 : i32
    %31 = arith.index_cast %c2_i32 : i32 to index
    %c0_22 = arith.constant 0 : index
    %c0_23 = arith.constant 0 : index
    %32 = vector.load %arg8[%31, %c0_22, %c0_23] : memref<8x2x32xf32, #tpu.memory_space<vmem>>, vector<1x2x32xf32>
    %33 = vector.shape_cast %32 : vector<1x2x32xf32> to vector<2x32xf32>
    %cst_24 = arith.constant dense<0.000000e+00> : vector<2x32xf32>
    %34 = tpu.matmul %26, %9, %cst_24 {dimension_numbers = #tpu.dot_dimension_numbers<[1], [0], [0], [1], [0, 0, 1, 1], [], []>} : vector<2x32xf32>, vector<32x32xf32>, vector<2x32xf32> -> vector<2x32xf32>
    %35 = arith.addf %33, %34 : vector<2x32xf32>
    %36 = math.tanh %35 : vector<2x32xf32>
    %37 = arith.index_cast %c2_i32 : i32 to index
    %c0_25 = arith.constant 0 : index
    %c0_26 = arith.constant 0 : index
    %38 = vector.load %arg8[%37, %c0_25, %c0_26] : memref<8x2x32xf32, #tpu.memory_space<vmem>>, vector<1x2x32xf32>
    %39 = vector.shape_cast %38 : vector<1x2x32xf32> to vector<2x32xf32>
    %40 = vector.shape_cast %36 : vector<2x32xf32> to vector<1x2x32xf32>
    tpu.vector_store %arg8[%37, %c0_25, %c0_26], %40 {strides = array<i32>} : memref<8x2x32xf32, #tpu.memory_space<vmem>>, vector<1x2x32xf32>,
    %c3_i32 = arith.constant 3 : i32
    %41 = arith.index_cast %c3_i32 : i32 to index
    %c0_27 = arith.constant 0 : index
    %c0_28 = arith.constant 0 : index
    %42 = vector.load %arg8[%41, %c0_27, %c0_28] : memref<8x2x32xf32, #tpu.memory_space<vmem>>, vector<1x2x32xf32>
    %43 = vector.shape_cast %42 : vector<1x2x32xf32> to vector<2x32xf32>
    %cst_29 = arith.constant dense<0.000000e+00> : vector<2x32xf32>
    %44 = tpu.matmul %36, %9, %cst_29 {dimension_numbers = #tpu.dot_dimension_numbers<[1], [0], [0], [1], [0, 0, 1, 1], [], []>} : vector<2x32xf32>, vector<32x32xf32>, vector<2x32xf32> -> vector<2x32xf32>
    %45 = arith.addf %43, %44 : vector<2x32xf32>
    %46 = math.tanh %45 : vector<2x32xf32>
    %47 = arith.index_cast %c3_i32 : i32 to index
    %c0_30 = arith.constant 0 : index
    %c0_31 = arith.constant 0 : index
    %48 = vector.load %arg8[%47, %c0_30, %c0_31] : memref<8x2x32xf32, #tpu.memory_space<vmem>>, vector<1x2x32xf32>
    %49 = vector.shape_cast %48 : vector<1x2x32xf32> to vector<2x32xf32>
    %50 = vector.shape_cast %46 : vector<2x32xf32> to vector<1x2x32xf32>
    tpu.vector_store %arg8[%47, %c0_30, %c0_31], %50 {strides = array<i32>} : memref<8x2x32xf32, #tpu.memory_space<vmem>>, vector<1x2x32xf32>,
    %c4_i32 = arith.constant 4 : i32
    %51 = arith.index_cast %c4_i32 : i32 to index
    %c0_32 = arith.constant 0 : index
    %c0_33 = arith.constant 0 : index
    %52 = vector.load %arg8[%51, %c0_32, %c0_33] : memref<8x2x32xf32, #tpu.memory_space<vmem>>, vector<1x2x32xf32>
    %53 = vector.shape_cast %52 : vector<1x2x32xf32> to vector<2x32xf32>
    %cst_34 = arith.constant dense<0.000000e+00> : vector<2x32xf32>
    %54 = tpu.matmul %46, %9, %cst_34 {dimension_numbers = #tpu.dot_dimension_numbers<[1], [0], [0], [1], [0, 0, 1, 1], [], []>} : vector<2x32xf32>, vector<32x32xf32>, vector<2x32xf32> -> vector<2x32xf32>
    %55 = arith.addf %53, %54 : vector<2x32xf32>
    %56 = math.tanh %55 : vector<2x32xf32>
    %57 = arith.index_cast %c4_i32 : i32 to index
    %c0_35 = arith.constant 0 : index
    %c0_36 = arith.constant 0 : index
    %58 = vector.load %arg8[%57, %c0_35, %c0_36] : memref<8x2x32xf32, #tpu.memory_space<vmem>>, vector<1x2x32xf32>
    %59 = vector.shape_cast %58 : vector<1x2x32xf32> to vector<2x32xf32>
    %60 = vector.shape_cast %56 : vector<2x32xf32> to vector<1x2x32xf32>
    tpu.vector_store %arg8[%57, %c0_35, %c0_36], %60 {strides = array<i32>} : memref<8x2x32xf32, #tpu.memory_space<vmem>>, vector<1x2x32xf32>,
    %c5_i32 = arith.constant 5 : i32
    %61 = arith.index_cast %c5_i32 : i32 to index
    %c0_37 = arith.constant 0 : index
    %c0_38 = arith.constant 0 : index
    %62 = vector.load %arg8[%61, %c0_37, %c0_38] : memref<8x2x32xf32, #tpu.memory_space<vmem>>, vector<1x2x32xf32>
    %63 = vector.shape_cast %62 : vector<1x2x32xf32> to vector<2x32xf32>
    %cst_39 = arith.constant dense<0.000000e+00> : vector<2x32xf32>
    %64 = tpu.matmul %56, %9, %cst_39 {dimension_numbers = #tpu.dot_dimension_numbers<[1], [0], [0], [1], [0, 0, 1, 1], [], []>} : vector<2x32xf32>, vector<32x32xf32>, vector<2x32xf32> -> vector<2x32xf32>
    %65 = arith.addf %63, %64 : vector<2x32xf32>
    %66 = math.tanh %65 : vector<2x32xf32>
    %67 = arith.index_cast %c5_i32 : i32 to index
    %c0_40 = arith.constant 0 : index
    %c0_41 = arith.constant 0 : index
    %68 = vector.load %arg8[%67, %c0_40, %c0_41] : memref<8x2x32xf32, #tpu.memory_space<vmem>>, vector<1x2x32xf32>
    %69 = vector.shape_cast %68 : vector<1x2x32xf32> to vector<2x32xf32>
    %70 = vector.shape_cast %66 : vector<2x32xf32> to vector<1x2x32xf32>
    tpu.vector_store %arg8[%67, %c0_40, %c0_41], %70 {strides = array<i32>} : memref<8x2x32xf32, #tpu.memory_space<vmem>>, vector<1x2x32xf32>,
    %c6_i32 = arith.constant 6 : i32
    %71 = arith.index_cast %c6_i32 : i32 to index
    %c0_42 = arith.constant 0 : index
    %c0_43 = arith.constant 0 : index
    %72 = vector.load %arg8[%71, %c0_42, %c0_43] : memref<8x2x32xf32, #tpu.memory_space<vmem>>, vector<1x2x32xf32>
    %73 = vector.shape_cast %72 : vector<1x2x32xf32> to vector<2x32xf32>
    %cst_44 = arith.constant dense<0.000000e+00> : vector<2x32xf32>
    %74 = tpu.matmul %66, %9, %cst_44 {dimension_numbers = #tpu.dot_dimension_numbers<[1], [0], [0], [1], [0, 0, 1, 1], [], []>} : vector<2x32xf32>, vector<32x32xf32>, vector<2x32xf32> -> vector<2x32xf32>
    %75 = arith.addf %73, %74 : vector<2x32xf32>
    %76 = math.tanh %75 : vector<2x32xf32>
    %77 = arith.index_cast %c6_i32 : i32 to index
    %c0_45 = arith.constant 0 : index
    %c0_46 = arith.constant 0 : index
    %78 = vector.load %arg8[%77, %c0_45, %c0_46] : memref<8x2x32xf32, #tpu.memory_space<vmem>>, vector<1x2x32xf32>
    %79 = vector.shape_cast %78 : vector<1x2x32xf32> to vector<2x32xf32>
    %80 = vector.shape_cast %76 : vector<2x32xf32> to vector<1x2x32xf32>
    tpu.vector_store %arg8[%77, %c0_45, %c0_46], %80 {strides = array<i32>} : memref<8x2x32xf32, #tpu.memory_space<vmem>>, vector<1x2x32xf32>,
    %c7_i32 = arith.constant 7 : i32
    %81 = arith.index_cast %c7_i32 : i32 to index
    %c0_47 = arith.constant 0 : index
    %c0_48 = arith.constant 0 : index
    %82 = vector.load %arg8[%81, %c0_47, %c0_48] : memref<8x2x32xf32, #tpu.memory_space<vmem>>, vector<1x2x32xf32>
    %83 = vector.shape_cast %82 : vector<1x2x32xf32> to vector<2x32xf32>
    %cst_49 = arith.constant dense<0.000000e+00> : vector<2x32xf32>
    %84 = tpu.matmul %76, %9, %cst_49 {dimension_numbers = #tpu.dot_dimension_numbers<[1], [0], [0], [1], [0, 0, 1, 1], [], []>} : vector<2x32xf32>, vector<32x32xf32>, vector<2x32xf32> -> vector<2x32xf32>
    %85 = arith.addf %83, %84 : vector<2x32xf32>
    %86 = math.tanh %85 : vector<2x32xf32>
    %87 = arith.index_cast %c7_i32 : i32 to index
    %c0_50 = arith.constant 0 : index
    %c0_51 = arith.constant 0 : index
    %88 = vector.load %arg8[%87, %c0_50, %c0_51] : memref<8x2x32xf32, #tpu.memory_space<vmem>>, vector<1x2x32xf32>
    %89 = vector.shape_cast %88 : vector<1x2x32xf32> to vector<2x32xf32>
    %90 = vector.shape_cast %86 : vector<2x32xf32> to vector<1x2x32xf32>
    tpu.vector_store %arg8[%87, %c0_50, %c0_51], %90 {strides = array<i32>} : memref<8x2x32xf32, #tpu.memory_space<vmem>>, vector<1x2x32xf32>,
    %c8_i32 = arith.constant 8 : i32
    %c0_52 = arith.constant 0 : index
    %c0_53 = arith.constant 0 : index
    %c0_54 = arith.constant 0 : index
    %91 = vector.load %arg8[%c0_52, %c0_53, %c0_54] : memref<8x2x32xf32, #tpu.memory_space<vmem>>, vector<8x2x32xf32>
    %92 = vector.shape_cast %91 : vector<8x2x32xf32> to vector<16x32xf32>
    %c0_55 = arith.constant 0 : index
    %c0_56 = arith.constant 0 : index
    %93 = vector.load %arg5[%c0_55, %c0_56] : memref<32x8xf32, #tpu.memory_space<vmem>>, vector<32x8xf32>
    %cst_57 = arith.constant dense<0.000000e+00> : vector<16x8xf32>
    %94 = tpu.matmul %92, %93, %cst_57 {dimension_numbers = #tpu.dot_dimension_numbers<[1], [0], [0], [1], [0, 0, 1, 1], [], []>} : vector<16x32xf32>, vector<32x8xf32>, vector<16x8xf32> -> vector<16x8xf32>
    %c0_58 = arith.constant 0 : index
    %c0_59 = arith.constant 0 : index
    %95 = vector.load %arg6[%c0_58, %c0_59] : memref<1x8xf32, #tpu.memory_space<vmem>>, vector<1x8xf32>
    %96 = vector.broadcast %95 : vector<1x8xf32> to vector<16x8xf32>
    %97 = arith.addf %94, %96 : vector<16x8xf32>
    %98 = vector.shape_cast %97 : vector<16x8xf32> to vector<8x2x8xf32>
    %c0_60 = arith.constant 0 : index
    %c0_61 = arith.constant 0 : index
    %c0_62 = arith.constant 0 : index
    %99 = vector.load %arg7[%c0_60, %c0_61, %c0_62] : memref<8x2x8xf32, #tpu.memory_space<vmem>>, vector<8x2x8xf32>
    tpu.vector_store %arg7[%c0_60, %c0_61, %c0_62], %98 {strides = array<i32>} : memref<8x2x8xf32, #tpu.memory_space<vmem>>, vector<8x2x8xf32>,
    return
  }
  func.func @transform_0(%arg0: i32) -> (i32, i32, i32) {
    %c0_i32 = arith.constant 0 : i32
    %c0_i32_0 = arith.constant 0 : i32
    %c0_i32_1 = arith.constant 0 : i32
    return %c0_i32, %arg0, %c0_i32_0 : i32, i32, i32
  }
  func.func @transform_1(%arg0: i32) -> (i32, i32) {
    %c0_i32 = arith.constant 0 : i32
    %c0_i32_0 = arith.constant 0 : i32
    %c0_i32_1 = arith.constant 0 : i32
    return %c0_i32, %c0_i32_0 : i32, i32
  }
  func.func @transform_2(%arg0: i32) -> (i32, i32) {
    %c0_i32 = arith.constant 0 : i32
    %c0_i32_0 = arith.constant 0 : i32
    %c0_i32_1 = arith.constant 0 : i32
    return %c0_i32, %c0_i32_0 : i32, i32
  }
  func.func @transform_3(%arg0: i32) -> (i32, i32) {
    %c0_i32 = arith.constant 0 : i32
    %c0_i32_0 = arith.constant 0 : i32
    %c0_i32_1 = arith.constant 0 : i32
    return %c0_i32, %c0_i32_0 : i32, i32
  }
  func.func @transform_4(%arg0: i32) -> (i32, i32) {
    %c0_i32 = arith.constant 0 : i32
    %c0_i32_0 = arith.constant 0 : i32
    %c0_i32_1 = arith.constant 0 : i32
    return %c0_i32, %c0_i32_0 : i32, i32
  }
  func.func @transform_5(%arg0: i32) -> (i32, i32) {
    %c0_i32 = arith.constant 0 : i32
    %c0_i32_0 = arith.constant 0 : i32
    %c0_i32_1 = arith.constant 0 : i32
    return %c0_i32, %c0_i32_0 : i32, i32
  }
  func.func @transform_6(%arg0: i32) -> (i32, i32, i32) {
    %c0_i32 = arith.constant 0 : i32
    %c0_i32_0 = arith.constant 0 : i32
    %c0_i32_1 = arith.constant 0 : i32
    return %c0_i32, %arg0, %c0_i32_0 : i32, i32, i32
  }
}

</mosaic_0001>

<llo_original>
// kernel: tpu_custom_call.1
$region0: #{tpu_custom_call.1}
  #allocation0 [shape = 'u32[]', space=smem, size = 0x4, offset = 0x4, fixed_abs, tag = 'smem constant byte address 0x4 - core index']
  #allocation1 [shape = 'u32[144,128]{1,0:T(1,128)}', space=vmem, size = 0x12000, scoped, tag = 'internal scratch']
  #allocation2 [shape = 'f32[8,2,32]{2,1,0:T(2,128)}', space=vmem, size = 0x2000, scoped, tag = 'scratch operand']
  %s0 = inlined_call_operand.vmem [shape: f32[8,2,4], index: 0, kind: input, shape index: {}]
  %s1 = inlined_call_operand.vmem [shape: f32[4,32], index: 1, kind: input, shape index: {}]
  %s2 = inlined_call_operand.vmem [shape: f32[32,32], index: 2, kind: input, shape index: {}]
  %s3 = inlined_call_operand.vmem [shape: f32[1,32], index: 3, kind: input, shape index: {}]
  %s4 = inlined_call_operand.vmem [shape: f32[32,8], index: 4, kind: input, shape index: {}]
  %s5 = inlined_call_operand.vmem [shape: f32[1,8], index: 5, kind: input, shape index: {}]
  %s6 = inlined_call_operand.hbm [shape: f32[8,2,8], index: 6, kind: output, shape index: {}]
  %s7 = sld [smem:[#allocation0]]
  $region34: #{tpu_custom_call.1} parent=0
    _
  %s9 = ssub.s32 1, %s7
  %s10 = scalar_select 0, %s9, %s7
  $region1: #{tpu_custom_call.1} parent=0
    #allocation3 [shape = 'u8[8192]{0}', space=vmem, size = 0x2000, scoped, tag = 'output window, operand 0, single buffered']
    #allocation4 [shape = 's32[1]{0}', space=sflag, size = 0x4, scoped, tag = 'scoped memory for tpu_custom_call.1']
    %11 = vsyncpa [#allocation4], 0
    // Predicated region
    $region2: #{tpu_custom_call.1} parent=1 // pred_check
      _
    $region3: #{tpu_custom_call.1} parent=1 // pred_check_branch
      %13 = sbr.rel (0) target = $region5
    $region4: #{tpu_custom_call.1} parent=1 // pred_region
      _
    $region5: #{tpu_custom_call.1} parent=1 // pred_fallthru
      _
    // Predicated region
    $region6: #{tpu_custom_call.1} parent=1 // pred_check
      _
    $region7: #{tpu_custom_call.1} parent=1 // pred_check_branch
      %15 = sbr.rel (0) target = $region9
    $region8: #{tpu_custom_call.1} parent=1 // pred_region
      _
    $region9: #{tpu_custom_call.1} parent=1 // pred_fallthru
      _
    // Predicated region
    $region10: #{tpu_custom_call.1} parent=1 // pred_check
      _
    $region11: #{tpu_custom_call.1} parent=1 // pred_check_branch
      %17 = sbr.rel (0) target = $region13
    $region12: #{tpu_custom_call.1} parent=1 // pred_region
      _
    $region13: #{tpu_custom_call.1} parent=1 // pred_fallthru
      _
    // Predicated region
    $region14: #{tpu_custom_call.1} parent=1 // pred_check
      _
    $region15: #{tpu_custom_call.1} parent=1 // pred_check_branch
      %19 = sbr.rel (0) target = $region17
    $region16: #{tpu_custom_call.1} parent=1 // pred_region
      _
    $region17: #{tpu_custom_call.1} parent=1 // pred_fallthru
      _
    // Predicated region
    $region18: #{tpu_custom_call.1} parent=1 // pred_check
      _
    $region19: #{tpu_custom_call.1} parent=1 // pred_check_branch
      %21 = sbr.rel (0) target = $region21
    $region20: #{tpu_custom_call.1} parent=1 // pred_region
      _
    $region21: #{tpu_custom_call.1} parent=1 // pred_fallthru
      _
    // Predicated region
    $region22: #{tpu_custom_call.1} parent=1 // pred_check
      _
    $region23: #{tpu_custom_call.1} parent=1 // pred_check_branch
      %23 = sbr.rel (0) target = $region25
    $region24: #{tpu_custom_call.1} parent=1 // pred_region
      _
    $region25: #{tpu_custom_call.1} parent=1 // pred_fallthru
      _
    %v24 = vld [vmem:[%s0] sm:$0x3]
    %v25 = vld [vmem:[%s0 + $0x2] sm:$0x3]
    %v26 = vld [vmem:[%s0 + $0x4] sm:$0x3]
    %v27 = vld [vmem:[%s0 + $0x6] sm:$0x3]
    %v28 = vld [vmem:[%s0 + $0x8] sm:$0x3]
    %v29 = vld [vmem:[%s0 + $0xa] sm:$0x3]
    %v30 = vld [vmem:[%s0 + $0xc] sm:$0x3]
    %v31 = vld [vmem:[%s0 + $0xe] sm:$0x3]
    %v32 = vld [vmem:[%s1] sm:$0xf]
    %v33 = vld [vmem:[%s3] sm:$0x1]
    %v35 = vlaneseq
    %v36 = vshrl.u32 %v35, 7
    %v37 = vsub.s32 0, %v36
    %v38 = vrot.slane %v33, %v37
    %v48 = vcombine.low %v24, %v25
    %v49 = vcombine.low %v26, %v27
    %v51 = vunpack.c.l.s4 1983009808
    %v52 = vunpack.c.0.s8 %v51
    %v53 = vlaneseq
    %v54 = vshrl.u32 %v53, 7
    %v55 = vsub.s32 %v52, %v54
    %v56 = vrot.slane %v48, %v55
    %v58 = vunpack.c.l.s4 1983009808
    %v59 = vunpack.c.0.s8 %v58
    %v60 = vlaneseq
    %v61 = vshrl.u32 %v60, 7
    %v62 = vsub.s32 %v59, %v61
    %v63 = vrot.slane %v49, %v62
    %v64 = vcombine.low %v56, %v63
    %v65 = vcombine.low %v28, %v29
    %v66 = vcombine.low %v30, %v31
    %v68 = vunpack.c.l.s4 1983009808
    %v69 = vunpack.c.0.s8 %v68
    %v70 = vlaneseq
    %v71 = vshrl.u32 %v70, 7
    %v72 = vsub.s32 %v69, %v71
    %v73 = vrot.slane %v65, %v72
    %v75 = vunpack.c.l.s4 1983009808
    %v76 = vunpack.c.0.s8 %v75
    %v77 = vlaneseq
    %v78 = vshrl.u32 %v77, 7
    %v79 = vsub.s32 %v76, %v78
    %v80 = vrot.slane %v66, %v79
    %v81 = vcombine.low %v73, %v80
    %vm82 = vcmask 31744
    %v83 = vsel %vm82, %v64, 0
    %v85 = vsel %vm82, %v81, 0
    %vm87 = vcmask 1043456
    %v89 = vsel %vm87, %v32, 0
    %91 = vmatprep.subr.mxu0 0.0
    %92 = vmatpush1.msra.mxu0 %v89
    %93 = vmatprep.subr.mxu0 0.0
    %94 = vmatpush1.msra.mxu0 0.0
    %95 = vmatprep.subr.mxu0 0.0
    %96 = vmatpush1.msra.mxu0 0.0
    %97 = vmatprep.subr.mxu0 0.0
    %98 = vmatpush1.msra.mxu0 0.0
    %99 = vmatprep.subr.mxu0 0.0
    %100 = vmatpush1.msra.mxu0 0.0
    %101 = vmatprep.subr.mxu0 0.0
    %102 = vmatpush1.msra.mxu0 0.0
    %103 = vmatprep.subr.mxu0 0.0
    %104 = vmatpush1.msra.mxu0 0.0
    %105 = vmatprep.subr.mxu0 0.0
    %106 = vmatpush1.msra.mxu0 0.0
    %107 = vmatprep.subr.mxu0 0.0
    %108 = vmatpush1.msra.mxu0 0.0
    %109 = vmatprep.subr.mxu0 0.0
    %110 = vmatpush1.msra.mxu0 0.0
    %111 = vmatprep.subr.mxu0 0.0
    %112 = vmatpush1.msra.mxu0 0.0
    %113 = vmatprep.subr.mxu0 0.0
    %114 = vmatpush1.msra.mxu0 0.0
    %115 = vmatprep.subr.mxu0 0.0
    %116 = vmatpush1.msra.mxu0 0.0
    %117 = vmatprep.subr.mxu0 0.0
    %118 = vmatpush1.msra.mxu0 0.0
    %119 = vmatprep.subr.mxu0 0.0
    %120 = vmatpush1.msra.mxu0 0.0
    %121 = vmatprep.subr.mxu0 0.0
    %122 = vmatpush1.msra.mxu0 0.0
    %123 = vmatprep.subr.mxu0 0.0
    %124 = vmatpush1.msra.mxu0 0.0
    %125 = vmatprep.subr.mxu0 0.0
    %126 = vmatpush1.msra.mxu0 0.0
    %127 = vmatprep.subr.mxu0 0.0
    %128 = vmatpush1.msra.mxu0 0.0
    %129 = vmatprep.subr.mxu0 0.0
    %130 = vmatpush1.msra.mxu0 0.0
    %131 = vmatprep.subr.mxu0 0.0
    %132 = vmatpush1.msra.mxu0 0.0
    %133 = vmatprep.subr.mxu0 0.0
    %134 = vmatpush1.msra.mxu0 0.0
    %135 = vmatprep.subr.mxu0 0.0
    %136 = vmatpush1.msra.mxu0 0.0
    %137 = vmatprep.subr.mxu0 0.0
    %138 = vmatpush1.msra.mxu0 0.0
    %139 = vmatprep.subr.mxu0 0.0
    %140 = vmatpush1.msra.mxu0 0.0
    %141 = vmatprep.subr.mxu0 0.0
    %142 = vmatpush1.msra.mxu0 0.0
    %143 = vmatprep.subr.mxu0 0.0
    %144 = vmatpush1.msra.mxu0 0.0
    %145 = vmatprep.subr.mxu0 0.0
    %146 = vmatpush1.msra.mxu0 0.0
    %147 = vmatprep.subr.mxu0 0.0
    %148 = vmatpush1.msra.mxu0 0.0
    %149 = vmatprep.subr.mxu0 0.0
    %150 = vmatpush1.msra.mxu0 0.0
    %151 = vmatprep.subr.mxu0 0.0
    %152 = vmatpush1.msra.mxu0 0.0
    %153 = vmatprep.subr.mxu0 0.0
    %154 = vmatpush1.msra.mxu0 0.0
    %155 = vmatprep.mubr.f32.mxu0 0.0
    %156 = vmatmul.mubr.f32.gmra.mrb[0].mxu0 %v83
    %v157 = vpop.f32.mrb[0].mxu0
    %v158 = vadd.f32 %v38, %v157
    %v159 = vpop.f32.mrb[0].mxu0
    %160 = vmatprep.mubr.f32.mxu0 0.0
    %161 = vmatmul.mubr.f32.gmra.mrb[0].mxu0 %v85
    %v162 = vpop.f32.mrb[0].mxu0
    %v163 = vadd.f32 %v38, %v162
    %v164 = vpop.f32.mrb[0].mxu0
    %165 = vdwg.mxu0
    %v168 = vcombine.high %v158, %v158
    %v170 = vunpack.c.l.s4 1983009808
    %v171 = vunpack.c.0.s8 %v170
    %v172 = vlaneseq
    %v173 = vshrl.u32 %v172, 7
    %v174 = vsub.s32 %v171, %v173
    %v175 = vrot.slane %v158, %v174
    %v177 = vunpack.c.l.s4 1983009808
    %v178 = vunpack.c.0.s8 %v177
    %v179 = vlaneseq
    %v180 = vshrl.u32 %v179, 7
    %v181 = vsub.s32 %v178, %v180
    %v182 = vrot.slane %v168, %v181
    %v183 = vcombine.high %v175, %v175
    %v184 = vcombine.high %v182, %v182
    %v185 = vcombine.high %v163, %v163
    %v187 = vunpack.c.l.s4 1983009808
    %v188 = vunpack.c.0.s8 %v187
    %v189 = vlaneseq
    %v190 = vshrl.u32 %v189, 7
    %v191 = vsub.s32 %v188, %v190
    %v192 = vrot.slane %v163, %v191
    %v194 = vunpack.c.l.s4 1983009808
    %v195 = vunpack.c.0.s8 %v194
    %v196 = vlaneseq
    %v197 = vshrl.u32 %v196, 7
    %v198 = vsub.s32 %v195, %v197
    %v199 = vrot.slane %v185, %v198
    %v200 = vcombine.high %v192, %v192
    %v201 = vcombine.high %v199, %v199
    %vm210 = vcmask 254976
    %211 = vst.msk [vmem:[#allocation2] sm:$0x3] %vm210, %v175
    %212 = vst.msk [vmem:[#allocation2 + $0x2] sm:$0x3] %vm210, %v183
    %213 = vst.msk [vmem:[#allocation2 + $0x4] sm:$0x3] %vm210, %v182
    %214 = vst.msk [vmem:[#allocation2 + $0x6] sm:$0x3] %vm210, %v184
    %215 = vst.msk [vmem:[#allocation2 + $0x8] sm:$0x3] %vm210, %v192
    %216 = vst.msk [vmem:[#allocation2 + $0xa] sm:$0x3] %vm210, %v200
    %217 = vst.msk [vmem:[#allocation2 + $0xc] sm:$0x3] %vm210, %v199
    %218 = vst.msk [vmem:[#allocation2 + $0xe] sm:$0x3] %vm210, %v201
    %v219 = vld [vmem:[%s2] sm:$0xff]
    %v220 = vld [vmem:[%s2 + $0x8] sm:$0xff]
    %v221 = vld [vmem:[%s2 + $0x10] sm:$0xff]
    %v222 = vld [vmem:[%s2 + $0x18] sm:$0xff]
    %v223 = vld [vmem:[#allocation2] sm:$0x3]
    %vm224 = vcmask 261120
    %v226 = vsel %vm224, 0.0, 0
    %228 = vmatprep.subr.mxu0 0.0
    %229 = vmatpush1.msra.mxu0 %v219
    %230 = vmatprep.subr.mxu0 0.0
    %231 = vmatpush1.msra.mxu0 %v220
    %232 = vmatprep.subr.mxu0 0.0
    %233 = vmatpush1.msra.mxu0 %v221
    %234 = vmatprep.subr.mxu0 0.0
    %235 = vmatpush1.msra.mxu0 %v222
    %236 = vmatprep.subr.mxu0 0.0
    %237 = vmatpush1.msra.mxu0 0.0
    %238 = vmatprep.subr.mxu0 0.0
    %239 = vmatpush1.msra.mxu0 0.0
    %240 = vmatprep.subr.mxu0 0.0
    %241 = vmatpush1.msra.mxu0 0.0
    %242 = vmatprep.subr.mxu0 0.0
    %243 = vmatpush1.msra.mxu0 0.0
    %244 = vmatprep.subr.mxu0 0.0
    %245 = vmatpush1.msra.mxu0 0.0
    %246 = vmatprep.subr.mxu0 0.0
    %247 = vmatpush1.msra.mxu0 0.0
    %248 = vmatprep.subr.mxu0 0.0
    %249 = vmatpush1.msra.mxu0 0.0
    %250 = vmatprep.subr.mxu0 0.0
    %251 = vmatpush1.msra.mxu0 0.0
    %252 = vmatprep.subr.mxu0 0.0
    %253 = vmatpush1.msra.mxu0 0.0
    %254 = vmatprep.subr.mxu0 0.0
    %255 = vmatpush1.msra.mxu0 0.0
    %256 = vmatprep.subr.mxu0 0.0
    %257 = vmatpush1.msra.mxu0 0.0
    %258 = vmatprep.subr.mxu0 0.0
    %259 = vmatpush1.msra.mxu0 0.0
    %260 = vmatprep.subr.mxu0 0.0
    %261 = vmatpush1.msra.mxu0 0.0
    %262 = vmatprep.subr.mxu0 0.0
    %263 = vmatpush1.msra.mxu0 0.0
    %264 = vmatprep.subr.mxu0 0.0
    %265 = vmatpush1.msra.mxu0 0.0
    %266 = vmatprep.subr.mxu0 0.0
    %267 = vmatpush1.msra.mxu0 0.0
    %268 = vmatprep.subr.mxu0 0.0
    %269 = vmatpush1.msra.mxu0 0.0
    %270 = vmatprep.subr.mxu0 0.0
    %271 = vmatpush1.msra.mxu0 0.0
    %272 = vmatprep.subr.mxu0 0.0
    %273 = vmatpush1.msra.mxu0 0.0
    %274 = vmatprep.subr.mxu0 0.0
    %275 = vmatpush1.msra.mxu0 0.0
    %276 = vmatprep.subr.mxu0 0.0
    %277 = vmatpush1.msra.mxu0 0.0
    %278 = vmatprep.subr.mxu0 0.0
    %279 = vmatpush1.msra.mxu0 0.0
    %280 = vmatprep.subr.mxu0 0.0
    %281 = vmatpush1.msra.mxu0 0.0
    %282 = vmatprep.subr.mxu0 0.0
    %283 = vmatpush1.msra.mxu0 0.0
    %284 = vmatprep.subr.mxu0 0.0
    %285 = vmatpush1.msra.mxu0 0.0
    %286 = vmatprep.subr.mxu0 0.0
    %287 = vmatpush1.msra.mxu0 0.0
    %288 = vmatprep.subr.mxu0 0.0
    %289 = vmatpush1.msra.mxu0 0.0
    %290 = vmatprep.subr.mxu0 0.0
    %291 = vmatpush1.msra.mxu0 0.0
    %292 = vmatprep.mubr.f32.mxu0 0.0
    %293 = vmatmul.mubr.f32.gmra.mrb[0].mxu0 %v226
    %v294 = vpop.f32.mrb[0].mxu0
    %v295 = vadd.f32 0.0, %v294
    %v296 = vpop.f32.mrb[0].mxu0
    %297 = vdwg.mxu0
    %v298 = vadd.f32 %v223, %v295
    %v299 = vtanh.pop %v298
    %300 = vst.msk [vmem:[#allocation2] sm:$0x3] %vm210, %v299
    %s301 = scalar_lea.vmem [#allocation2], 2
    %v302 = vld [vmem:[%s301] sm:$0x3]
    %v304 = vsel %vm224, %v299, 0
    %306 = vmatprep.subr.mxu0 0.0
    %307 = vmatpush1.msra.mxu0 %v219
    %308 = vmatprep.subr.mxu0 0.0
    %309 = vmatpush1.msra.mxu0 %v220
    %310 = vmatprep.subr.mxu0 0.0
    %311 = vmatpush1.msra.mxu0 %v221
    %312 = vmatprep.subr.mxu0 0.0
    %313 = vmatpush1.msra.mxu0 %v222
    %314 = vmatprep.subr.mxu0 0.0
    %315 = vmatpush1.msra.mxu0 0.0
    %316 = vmatprep.subr.mxu0 0.0
    %317 = vmatpush1.msra.mxu0 0.0
    %318 = vmatprep.subr.mxu0 0.0
    %319 = vmatpush1.msra.mxu0 0.0
    %320 = vmatprep.subr.mxu0 0.0
    %321 = vmatpush1.msra.mxu0 0.0
    %322 = vmatprep.subr.mxu0 0.0
    %323 = vmatpush1.msra.mxu0 0.0
    %324 = vmatprep.subr.mxu0 0.0
    %325 = vmatpush1.msra.mxu0 0.0
    %326 = vmatprep.subr.mxu0 0.0
    %327 = vmatpush1.msra.mxu0 0.0
    %328 = vmatprep.subr.mxu0 0.0
    %329 = vmatpush1.msra.mxu0 0.0
    %330 = vmatprep.subr.mxu0 0.0
    %331 = vmatpush1.msra.mxu0 0.0
    %332 = vmatprep.subr.mxu0 0.0
    %333 = vmatpush1.msra.mxu0 0.0
    %334 = vmatprep.subr.mxu0 0.0
    %335 = vmatpush1.msra.mxu0 0.0
    %336 = vmatprep.subr.mxu0 0.0
    %337 = vmatpush1.msra.mxu0 0.0
    %338 = vmatprep.subr.mxu0 0.0
    %339 = vmatpush1.msra.mxu0 0.0
    %340 = vmatprep.subr.mxu0 0.0
    %341 = vmatpush1.msra.mxu0 0.0
    %342 = vmatprep.subr.mxu0 0.0
    %343 = vmatpush1.msra.mxu0 0.0
    %344 = vmatprep.subr.mxu0 0.0
    %345 = vmatpush1.msra.mxu0 0.0
    %346 = vmatprep.subr.mxu0 0.0
    %347 = vmatpush1.msra.mxu0 0.0
    %348 = vmatprep.subr.mxu0 0.0
    %349 = vmatpush1.msra.mxu0 0.0
    %350 = vmatprep.subr.mxu0 0.0
    %351 = vmatpush1.msra.mxu0 0.0
    %352 = vmatprep.subr.mxu0 0.0
    %353 = vmatpush1.msra.mxu0 0.0
    %354 = vmatprep.subr.mxu0 0.0
    %355 = vmatpush1.msra.mxu0 0.0
    %356 = vmatprep.subr.mxu0 0.0
    %357 = vmatpush1.msra.mxu0 0.0
    %358 = vmatprep.subr.mxu0 0.0
    %359 = vmatpush1.msra.mxu0 0.0
    %360 = vmatprep.subr.mxu0 0.0
    %361 = vmatpush1.msra.mxu0 0.0
    %362 = vmatprep.subr.mxu0 0.0
    %363 = vmatpush1.msra.mxu0 0.0
    %364 = vmatprep.subr.mxu0 0.0
    %365 = vmatpush1.msra.mxu0 0.0
    %366 = vmatprep.subr.mxu0 0.0
    %367 = vmatpush1.msra.mxu0 0.0
    %368 = vmatprep.subr.mxu0 0.0
    %369 = vmatpush1.msra.mxu0 0.0
    %370 = vmatprep.mubr.f32.mxu0 0.0
    %371 = vmatmul.mubr.f32.gmra.mrb[0].mxu0 %v304
    %v372 = vpop.f32.mrb[0].mxu0
    %v373 = vadd.f32 0.0, %v372
    %v374 = vpop.f32.mrb[0].mxu0
    %375 = vdwg.mxu0
    %v376 = vadd.f32 %v302, %v373
    %v377 = vtanh.pop %v376
    %378 = vst.msk [vmem:[%s301] sm:$0x3] %vm210, %v377
    %s379 = scalar_lea.vmem [#allocation2], 4
    %v380 = vld [vmem:[%s379] sm:$0x3]
    %v382 = vsel %vm224, %v377, 0
    %384 = vmatprep.subr.mxu0 0.0
    %385 = vmatpush1.msra.mxu0 %v219
    %386 = vmatprep.subr.mxu0 0.0
    %387 = vmatpush1.msra.mxu0 %v220
    %388 = vmatprep.subr.mxu0 0.0
    %389 = vmatpush1.msra.mxu0 %v221
    %390 = vmatprep.subr.mxu0 0.0
    %391 = vmatpush1.msra.mxu0 %v222
    %392 = vmatprep.subr.mxu0 0.0
    %393 = vmatpush1.msra.mxu0 0.0
    %394 = vmatprep.subr.mxu0 0.0
    %395 = vmatpush1.msra.mxu0 0.0
    %396 = vmatprep.subr.mxu0 0.0
    %397 = vmatpush1.msra.mxu0 0.0
    %398 = vmatprep.subr.mxu0 0.0
    %399 = vmatpush1.msra.mxu0 0.0
    %400 = vmatprep.subr.mxu0 0.0
    %401 = vmatpush1.msra.mxu0 0.0
    %402 = vmatprep.subr.mxu0 0.0
    %403 = vmatpush1.msra.mxu0 0.0
    %404 = vmatprep.subr.mxu0 0.0
    %405 = vmatpush1.msra.mxu0 0.0
    %406 = vmatprep.subr.mxu0 0.0
    %407 = vmatpush1.msra.mxu0 0.0
    %408 = vmatprep.subr.mxu0 0.0
    %409 = vmatpush1.msra.mxu0 0.0
    %410 = vmatprep.subr.mxu0 0.0
    %411 = vmatpush1.msra.mxu0 0.0
    %412 = vmatprep.subr.mxu0 0.0
    %413 = vmatpush1.msra.mxu0 0.0
    %414 = vmatprep.subr.mxu0 0.0
    %415 = vmatpush1.msra.mxu0 0.0
    %416 = vmatprep.subr.mxu0 0.0
    %417 = vmatpush1.msra.mxu0 0.0
    %418 = vmatprep.subr.mxu0 0.0
    %419 = vmatpush1.msra.mxu0 0.0
    %420 = vmatprep.subr.mxu0 0.0
    %421 = vmatpush1.msra.mxu0 0.0
    %422 = vmatprep.subr.mxu0 0.0
    %423 = vmatpush1.msra.mxu0 0.0
    %424 = vmatprep.subr.mxu0 0.0
    %425 = vmatpush1.msra.mxu0 0.0
    %426 = vmatprep.subr.mxu0 0.0
    %427 = vmatpush1.msra.mxu0 0.0
    %428 = vmatprep.subr.mxu0 0.0
    %429 = vmatpush1.msra.mxu0 0.0
    %430 = vmatprep.subr.mxu0 0.0
    %431 = vmatpush1.msra.mxu0 0.0
    %432 = vmatprep.subr.mxu0 0.0
    %433 = vmatpush1.msra.mxu0 0.0
    %434 = vmatprep.subr.mxu0 0.0
    %435 = vmatpush1.msra.mxu0 0.0
    %436 = vmatprep.subr.mxu0 0.0
    %437 = vmatpush1.msra.mxu0 0.0
    %438 = vmatprep.subr.mxu0 0.0
    %439 = vmatpush1.msra.mxu0 0.0
    %440 = vmatprep.subr.mxu0 0.0
    %441 = vmatpush1.msra.mxu0 0.0
    %442 = vmatprep.subr.mxu0 0.0
    %443 = vmatpush1.msra.mxu0 0.0
    %444 = vmatprep.subr.mxu0 0.0
    %445 = vmatpush1.msra.mxu0 0.0
    %446 = vmatprep.subr.mxu0 0.0
    %447 = vmatpush1.msra.mxu0 0.0
    %448 = vmatprep.mubr.f32.mxu0 0.0
    %449 = vmatmul.mubr.f32.gmra.mrb[0].mxu0 %v382
    %v450 = vpop.f32.mrb[0].mxu0
    %v451 = vadd.f32 0.0, %v450
    %v452 = vpop.f32.mrb[0].mxu0
    %453 = vdwg.mxu0
    %v454 = vadd.f32 %v380, %v451
    %v455 = vtanh.pop %v454
    %456 = vst.msk [vmem:[%s379] sm:$0x3] %vm210, %v455
    %s457 = scalar_lea.vmem [#allocation2], 6
    %v458 = vld [vmem:[%s457] sm:$0x3]
    %v460 = vsel %vm224, %v455, 0
    %462 = vmatprep.subr.mxu0 0.0
    %463 = vmatpush1.msra.mxu0 %v219
    %464 = vmatprep.subr.mxu0 0.0
    %465 = vmatpush1.msra.mxu0 %v220
    %466 = vmatprep.subr.mxu0 0.0
    %467 = vmatpush1.msra.mxu0 %v221
    %468 = vmatprep.subr.mxu0 0.0
    %469 = vmatpush1.msra.mxu0 %v222
    %470 = vmatprep.subr.mxu0 0.0
    %471 = vmatpush1.msra.mxu0 0.0
    %472 = vmatprep.subr.mxu0 0.0
    %473 = vmatpush1.msra.mxu0 0.0
    %474 = vmatprep.subr.mxu0 0.0
    %475 = vmatpush1.msra.mxu0 0.0
    %476 = vmatprep.subr.mxu0 0.0
    %477 = vmatpush1.msra.mxu0 0.0
    %478 = vmatprep.subr.mxu0 0.0
    %479 = vmatpush1.msra.mxu0 0.0
    %480 = vmatprep.subr.mxu0 0.0
    %481 = vmatpush1.msra.mxu0 0.0
    %482 = vmatprep.subr.mxu0 0.0
    %483 = vmatpush1.msra.mxu0 0.0
    %484 = vmatprep.subr.mxu0 0.0
    %485 = vmatpush1.msra.mxu0 0.0
    %486 = vmatprep.subr.mxu0 0.0
    %487 = vmatpush1.msra.mxu0 0.0
    %488 = vmatprep.subr.mxu0 0.0
    %489 = vmatpush1.msra.mxu0 0.0
    %490 = vmatprep.subr.mxu0 0.0
    %491 = vmatpush1.msra.mxu0 0.0
    %492 = vmatprep.subr.mxu0 0.0
    %493 = vmatpush1.msra.mxu0 0.0
    %494 = vmatprep.subr.mxu0 0.0
    %495 = vmatpush1.msra.mxu0 0.0
    %496 = vmatprep.subr.mxu0 0.0
    %497 = vmatpush1.msra.mxu0 0.0
    %498 = vmatprep.subr.mxu0 0.0
    %499 = vmatpush1.msra.mxu0 0.0
    %500 = vmatprep.subr.mxu0 0.0
    %501 = vmatpush1.msra.mxu0 0.0
    %502 = vmatprep.subr.mxu0 0.0
    %503 = vmatpush1.msra.mxu0 0.0
    %504 = vmatprep.subr.mxu0 0.0
    %505 = vmatpush1.msra.mxu0 0.0
    %506 = vmatprep.subr.mxu0 0.0
    %507 = vmatpush1.msra.mxu0 0.0
    %508 = vmatprep.subr.mxu0 0.0
    %509 = vmatpush1.msra.mxu0 0.0
    %510 = vmatprep.subr.mxu0 0.0
    %511 = vmatpush1.msra.mxu0 0.0
    %512 = vmatprep.subr.mxu0 0.0
    %513 = vmatpush1.msra.mxu0 0.0
    %514 = vmatprep.subr.mxu0 0.0
    %515 = vmatpush1.msra.mxu0 0.0
    %516 = vmatprep.subr.mxu0 0.0
    %517 = vmatpush1.msra.mxu0 0.0
    %518 = vmatprep.subr.mxu0 0.0
    %519 = vmatpush1.msra.mxu0 0.0
    %520 = vmatprep.subr.mxu0 0.0
    %521 = vmatpush1.msra.mxu0 0.0
    %522 = vmatprep.subr.mxu0 0.0
    %523 = vmatpush1.msra.mxu0 0.0
    %524 = vmatprep.subr.mxu0 0.0
    %525 = vmatpush1.msra.mxu0 0.0
    %526 = vmatprep.mubr.f32.mxu0 0.0
    %527 = vmatmul.mubr.f32.gmra.mrb[0].mxu0 %v460
    %v528 = vpop.f32.mrb[0].mxu0
    %v529 = vadd.f32 0.0, %v528
    %v530 = vpop.f32.mrb[0].mxu0
    %531 = vdwg.mxu0
    %v532 = vadd.f32 %v458, %v529
    %v533 = vtanh.pop %v532
    %534 = vst.msk [vmem:[%s457] sm:$0x3] %vm210, %v533
    %s535 = scalar_lea.vmem [#allocation2], 8
    %v536 = vld [vmem:[%s535] sm:$0x3]
    %v538 = vsel %vm224, %v533, 0
    %540 = vmatprep.subr.mxu0 0.0
    %541 = vmatpush1.msra.mxu0 %v219
    %542 = vmatprep.subr.mxu0 0.0
    %543 = vmatpush1.msra.mxu0 %v220
    %544 = vmatprep.subr.mxu0 0.0
    %545 = vmatpush1.msra.mxu0 %v221
    %546 = vmatprep.subr.mxu0 0.0
    %547 = vmatpush1.msra.mxu0 %v222
    %548 = vmatprep.subr.mxu0 0.0
    %549 = vmatpush1.msra.mxu0 0.0
    %550 = vmatprep.subr.mxu0 0.0
    %551 = vmatpush1.msra.mxu0 0.0
    %552 = vmatprep.subr.mxu0 0.0
    %553 = vmatpush1.msra.mxu0 0.0
    %554 = vmatprep.subr.mxu0 0.0
    %555 = vmatpush1.msra.mxu0 0.0
    %556 = vmatprep.subr.mxu0 0.0
    %557 = vmatpush1.msra.mxu0 0.0
    %558 = vmatprep.subr.mxu0 0.0
    %559 = vmatpush1.msra.mxu0 0.0
    %560 = vmatprep.subr.mxu0 0.0
    %561 = vmatpush1.msra.mxu0 0.0
    %562 = vmatprep.subr.mxu0 0.0
    %563 = vmatpush1.msra.mxu0 0.0
    %564 = vmatprep.subr.mxu0 0.0
    %565 = vmatpush1.msra.mxu0 0.0
    %566 = vmatprep.subr.mxu0 0.0
    %567 = vmatpush1.msra.mxu0 0.0
    %568 = vmatprep.subr.mxu0 0.0
    %569 = vmatpush1.msra.mxu0 0.0
    %570 = vmatprep.subr.mxu0 0.0
    %571 = vmatpush1.msra.mxu0 0.0
    %572 = vmatprep.subr.mxu0 0.0
    %573 = vmatpush1.msra.mxu0 0.0
    %574 = vmatprep.subr.mxu0 0.0
    %575 = vmatpush1.msra.mxu0 0.0
    %576 = vmatprep.subr.mxu0 0.0
    %577 = vmatpush1.msra.mxu0 0.0
    %578 = vmatprep.subr.mxu0 0.0
    %579 = vmatpush1.msra.mxu0 0.0
    %580 = vmatprep.subr.mxu0 0.0
    %581 = vmatpush1.msra.mxu0 0.0
    %582 = vmatprep.subr.mxu0 0.0
    %583 = vmatpush1.msra.mxu0 0.0
    %584 = vmatprep.subr.mxu0 0.0
    %585 = vmatpush1.msra.mxu0 0.0
    %586 = vmatprep.subr.mxu0 0.0
    %587 = vmatpush1.msra.mxu0 0.0
    %588 = vmatprep.subr.mxu0 0.0
    %589 = vmatpush1.msra.mxu0 0.0
    %590 = vmatprep.subr.mxu0 0.0
    %591 = vmatpush1.msra.mxu0 0.0
    %592 = vmatprep.subr.mxu0 0.0
    %593 = vmatpush1.msra.mxu0 0.0
    %594 = vmatprep.subr.mxu0 0.0
    %595 = vmatpush1.msra.mxu0 0.0
    %596 = vmatprep.subr.mxu0 0.0
    %597 = vmatpush1.msra.mxu0 0.0
    %598 = vmatprep.subr.mxu0 0.0
    %599 = vmatpush1.msra.mxu0 0.0
    %600 = vmatprep.subr.mxu0 0.0
    %601 = vmatpush1.msra.mxu0 0.0
    %602 = vmatprep.subr.mxu0 0.0
    %603 = vmatpush1.msra.mxu0 0.0
    %604 = vmatprep.mubr.f32.mxu0 0.0
    %605 = vmatmul.mubr.f32.gmra.mrb[0].mxu0 %v538
    %v606 = vpop.f32.mrb[0].mxu0
    %v607 = vadd.f32 0.0, %v606
    %v608 = vpop.f32.mrb[0].mxu0
    %609 = vdwg.mxu0
    %v610 = vadd.f32 %v536, %v607
    %v611 = vtanh.pop %v610
    %612 = vst.msk [vmem:[%s535] sm:$0x3] %vm210, %v611
    %s613 = scalar_lea.vmem [#allocation2], 10
    %v614 = vld [vmem:[%s613] sm:$0x3]
    %v616 = vsel %vm224, %v611, 0
    %618 = vmatprep.subr.mxu0 0.0
    %619 = vmatpush1.msra.mxu0 %v219
    %620 = vmatprep.subr.mxu0 0.0
    %621 = vmatpush1.msra.mxu0 %v220
    %622 = vmatprep.subr.mxu0 0.0
    %623 = vmatpush1.msra.mxu0 %v221
    %624 = vmatprep.subr.mxu0 0.0
    %625 = vmatpush1.msra.mxu0 %v222
    %626 = vmatprep.subr.mxu0 0.0
    %627 = vmatpush1.msra.mxu0 0.0
    %628 = vmatprep.subr.mxu0 0.0
    %629 = vmatpush1.msra.mxu0 0.0
    %630 = vmatprep.subr.mxu0 0.0
    %631 = vmatpush1.msra.mxu0 0.0
    %632 = vmatprep.subr.mxu0 0.0
    %633 = vmatpush1.msra.mxu0 0.0
    %634 = vmatprep.subr.mxu0 0.0
    %635 = vmatpush1.msra.mxu0 0.0
    %636 = vmatprep.subr.mxu0 0.0
    %637 = vmatpush1.msra.mxu0 0.0
    %638 = vmatprep.subr.mxu0 0.0
    %639 = vmatpush1.msra.mxu0 0.0
    %640 = vmatprep.subr.mxu0 0.0
    %641 = vmatpush1.msra.mxu0 0.0
    %642 = vmatprep.subr.mxu0 0.0
    %643 = vmatpush1.msra.mxu0 0.0
    %644 = vmatprep.subr.mxu0 0.0
    %645 = vmatpush1.msra.mxu0 0.0
    %646 = vmatprep.subr.mxu0 0.0
    %647 = vmatpush1.msra.mxu0 0.0
    %648 = vmatprep.subr.mxu0 0.0
    %649 = vmatpush1.msra.mxu0 0.0
    %650 = vmatprep.subr.mxu0 0.0
    %651 = vmatpush1.msra.mxu0 0.0
    %652 = vmatprep.subr.mxu0 0.0
    %653 = vmatpush1.msra.mxu0 0.0
    %654 = vmatprep.subr.mxu0 0.0
    %655 = vmatpush1.msra.mxu0 0.0
    %656 = vmatprep.subr.mxu0 0.0
    %657 = vmatpush1.msra.mxu0 0.0
    %658 = vmatprep.subr.mxu0 0.0
    %659 = vmatpush1.msra.mxu0 0.0
    %660 = vmatprep.subr.mxu0 0.0
    %661 = vmatpush1.msra.mxu0 0.0
    %662 = vmatprep.subr.mxu0 0.0
    %663 = vmatpush1.msra.mxu0 0.0
    %664 = vmatprep.subr.mxu0 0.0
    %665 = vmatpush1.msra.mxu0 0.0
    %666 = vmatprep.subr.mxu0 0.0
    %667 = vmatpush1.msra.mxu0 0.0
    %668 = vmatprep.subr.mxu0 0.0
    %669 = vmatpush1.msra.mxu0 0.0
    %670 = vmatprep.subr.mxu0 0.0
    %671 = vmatpush1.msra.mxu0 0.0
    %672 = vmatprep.subr.mxu0 0.0
    %673 = vmatpush1.msra.mxu0 0.0
    %674 = vmatprep.subr.mxu0 0.0
    %675 = vmatpush1.msra.mxu0 0.0
    %676 = vmatprep.subr.mxu0 0.0
    %677 = vmatpush1.msra.mxu0 0.0
    %678 = vmatprep.subr.mxu0 0.0
    %679 = vmatpush1.msra.mxu0 0.0
    %680 = vmatprep.subr.mxu0 0.0
    %681 = vmatpush1.msra.mxu0 0.0
    %682 = vmatprep.mubr.f32.mxu0 0.0
    %683 = vmatmul.mubr.f32.gmra.mrb[0].mxu0 %v616
    %v684 = vpop.f32.mrb[0].mxu0
    %v685 = vadd.f32 0.0, %v684
    %v686 = vpop.f32.mrb[0].mxu0
    %687 = vdwg.mxu0
    %v688 = vadd.f32 %v614, %v685
    %v689 = vtanh.pop %v688
    %690 = vst.msk [vmem:[%s613] sm:$0x3] %vm210, %v689
    %s691 = scalar_lea.vmem [#allocation2], 12
    %v692 = vld [vmem:[%s691] sm:$0x3]
    %v694 = vsel %vm224, %v689, 0
    %696 = vmatprep.subr.mxu0 0.0
    %697 = vmatpush1.msra.mxu0 %v219
    %698 = vmatprep.subr.mxu0 0.0
    %699 = vmatpush1.msra.mxu0 %v220
    %700 = vmatprep.subr.mxu0 0.0
    %701 = vmatpush1.msra.mxu0 %v221
    %702 = vmatprep.subr.mxu0 0.0
    %703 = vmatpush1.msra.mxu0 %v222
    %704 = vmatprep.subr.mxu0 0.0
    %705 = vmatpush1.msra.mxu0 0.0
    %706 = vmatprep.subr.mxu0 0.0
    %707 = vmatpush1.msra.mxu0 0.0
    %708 = vmatprep.subr.mxu0 0.0
    %709 = vmatpush1.msra.mxu0 0.0
    %710 = vmatprep.subr.mxu0 0.0
    %711 = vmatpush1.msra.mxu0 0.0
    %712 = vmatprep.subr.mxu0 0.0
    %713 = vmatpush1.msra.mxu0 0.0
    %714 = vmatprep.subr.mxu0 0.0
    %715 = vmatpush1.msra.mxu0 0.0
    %716 = vmatprep.subr.mxu0 0.0
    %717 = vmatpush1.msra.mxu0 0.0
    %718 = vmatprep.subr.mxu0 0.0
    %719 = vmatpush1.msra.mxu0 0.0
    %720 = vmatprep.subr.mxu0 0.0
    %721 = vmatpush1.msra.mxu0 0.0
    %722 = vmatprep.subr.mxu0 0.0
    %723 = vmatpush1.msra.mxu0 0.0
    %724 = vmatprep.subr.mxu0 0.0
    %725 = vmatpush1.msra.mxu0 0.0
    %726 = vmatprep.subr.mxu0 0.0
    %727 = vmatpush1.msra.mxu0 0.0
    %728 = vmatprep.subr.mxu0 0.0
    %729 = vmatpush1.msra.mxu0 0.0
    %730 = vmatprep.subr.mxu0 0.0
    %731 = vmatpush1.msra.mxu0 0.0
    %732 = vmatprep.subr.mxu0 0.0
    %733 = vmatpush1.msra.mxu0 0.0
    %734 = vmatprep.subr.mxu0 0.0
    %735 = vmatpush1.msra.mxu0 0.0
    %736 = vmatprep.subr.mxu0 0.0
    %737 = vmatpush1.msra.mxu0 0.0
    %738 = vmatprep.subr.mxu0 0.0
    %739 = vmatpush1.msra.mxu0 0.0
    %740 = vmatprep.subr.mxu0 0.0
    %741 = vmatpush1.msra.mxu0 0.0
    %742 = vmatprep.subr.mxu0 0.0
    %743 = vmatpush1.msra.mxu0 0.0
    %744 = vmatprep.subr.mxu0 0.0
    %745 = vmatpush1.msra.mxu0 0.0
    %746 = vmatprep.subr.mxu0 0.0
    %747 = vmatpush1.msra.mxu0 0.0
    %748 = vmatprep.subr.mxu0 0.0
    %749 = vmatpush1.msra.mxu0 0.0
    %750 = vmatprep.subr.mxu0 0.0
    %751 = vmatpush1.msra.mxu0 0.0
    %752 = vmatprep.subr.mxu0 0.0
    %753 = vmatpush1.msra.mxu0 0.0
    %754 = vmatprep.subr.mxu0 0.0
    %755 = vmatpush1.msra.mxu0 0.0
    %756 = vmatprep.subr.mxu0 0.0
    %757 = vmatpush1.msra.mxu0 0.0
    %758 = vmatprep.subr.mxu0 0.0
    %759 = vmatpush1.msra.mxu0 0.0
    %760 = vmatprep.mubr.f32.mxu0 0.0
    %761 = vmatmul.mubr.f32.gmra.mrb[0].mxu0 %v694
    %v762 = vpop.f32.mrb[0].mxu0
    %v763 = vadd.f32 0.0, %v762
    %v764 = vpop.f32.mrb[0].mxu0
    %765 = vdwg.mxu0
    %v766 = vadd.f32 %v692, %v763
    %v767 = vtanh.pop %v766
    %768 = vst.msk [vmem:[%s691] sm:$0x3] %vm210, %v767
    %s769 = scalar_lea.vmem [#allocation2], 14
    %v770 = vld [vmem:[%s769] sm:$0x3]
    %v772 = vsel %vm224, %v767, 0
    %774 = vmatprep.subr.mxu0 0.0
    %775 = vmatpush1.msra.mxu0 %v219
    %776 = vmatprep.subr.mxu0 0.0
    %777 = vmatpush1.msra.mxu0 %v220
    %778 = vmatprep.subr.mxu0 0.0
    %779 = vmatpush1.msra.mxu0 %v221
    %780 = vmatprep.subr.mxu0 0.0
    %781 = vmatpush1.msra.mxu0 %v222
    %782 = vmatprep.subr.mxu0 0.0
    %783 = vmatpush1.msra.mxu0 0.0
    %784 = vmatprep.subr.mxu0 0.0
    %785 = vmatpush1.msra.mxu0 0.0
    %786 = vmatprep.subr.mxu0 0.0
    %787 = vmatpush1.msra.mxu0 0.0
    %788 = vmatprep.subr.mxu0 0.0
    %789 = vmatpush1.msra.mxu0 0.0
    %790 = vmatprep.subr.mxu0 0.0
    %791 = vmatpush1.msra.mxu0 0.0
    %792 = vmatprep.subr.mxu0 0.0
    %793 = vmatpush1.msra.mxu0 0.0
    %794 = vmatprep.subr.mxu0 0.0
    %795 = vmatpush1.msra.mxu0 0.0
    %796 = vmatprep.subr.mxu0 0.0
    %797 = vmatpush1.msra.mxu0 0.0
    %798 = vmatprep.subr.mxu0 0.0
    %799 = vmatpush1.msra.mxu0 0.0
    %800 = vmatprep.subr.mxu0 0.0
    %801 = vmatpush1.msra.mxu0 0.0
    %802 = vmatprep.subr.mxu0 0.0
    %803 = vmatpush1.msra.mxu0 0.0
    %804 = vmatprep.subr.mxu0 0.0
    %805 = vmatpush1.msra.mxu0 0.0
    %806 = vmatprep.subr.mxu0 0.0
    %807 = vmatpush1.msra.mxu0 0.0
    %808 = vmatprep.subr.mxu0 0.0
    %809 = vmatpush1.msra.mxu0 0.0
    %810 = vmatprep.subr.mxu0 0.0
    %811 = vmatpush1.msra.mxu0 0.0
    %812 = vmatprep.subr.mxu0 0.0
    %813 = vmatpush1.msra.mxu0 0.0
    %814 = vmatprep.subr.mxu0 0.0
    %815 = vmatpush1.msra.mxu0 0.0
    %816 = vmatprep.subr.mxu0 0.0
    %817 = vmatpush1.msra.mxu0 0.0
    %818 = vmatprep.subr.mxu0 0.0
    %819 = vmatpush1.msra.mxu0 0.0
    %820 = vmatprep.subr.mxu0 0.0
    %821 = vmatpush1.msra.mxu0 0.0
    %822 = vmatprep.subr.mxu0 0.0
    %823 = vmatpush1.msra.mxu0 0.0
    %824 = vmatprep.subr.mxu0 0.0
    %825 = vmatpush1.msra.mxu0 0.0
    %826 = vmatprep.subr.mxu0 0.0
    %827 = vmatpush1.msra.mxu0 0.0
    %828 = vmatprep.subr.mxu0 0.0
    %829 = vmatpush1.msra.mxu0 0.0
    %830 = vmatprep.subr.mxu0 0.0
    %831 = vmatpush1.msra.mxu0 0.0
    %832 = vmatprep.subr.mxu0 0.0
    %833 = vmatpush1.msra.mxu0 0.0
    %834 = vmatprep.subr.mxu0 0.0
    %835 = vmatpush1.msra.mxu0 0.0
    %836 = vmatprep.subr.mxu0 0.0
    %837 = vmatpush1.msra.mxu0 0.0
    %838 = vmatprep.mubr.f32.mxu0 0.0
    %839 = vmatmul.mubr.f32.gmra.mrb[0].mxu0 %v772
    %v840 = vpop.f32.mrb[0].mxu0
    %v841 = vadd.f32 0.0, %v840
    %v842 = vpop.f32.mrb[0].mxu0
    %843 = vdwg.mxu0
    %v844 = vadd.f32 %v770, %v841
    %v845 = vtanh.pop %v844
    %846 = vst.msk [vmem:[%s769] sm:$0x3] %vm210, %v845
    %v847 = vld [vmem:[#allocation2] sm:$0x3]
    %v848 = vld [vmem:[#allocation2 + $0x2] sm:$0x3]
    %v849 = vld [vmem:[#allocation2 + $0x4] sm:$0x3]
    %v850 = vld [vmem:[#allocation2 + $0x6] sm:$0x3]
    %v851 = vld [vmem:[#allocation2 + $0x8] sm:$0x3]
    %v852 = vld [vmem:[#allocation2 + $0xa] sm:$0x3]
    %v853 = vld [vmem:[#allocation2 + $0xc] sm:$0x3]
    %v854 = vld [vmem:[#allocation2 + $0xe] sm:$0x3]
    %v855 = vld [vmem:[%s4] sm:$0xff]
    %v856 = vld [vmem:[%s4 + $0x8] sm:$0xff]
    %v857 = vld [vmem:[%s4 + $0x10] sm:$0xff]
    %v858 = vld [vmem:[%s4 + $0x18] sm:$0xff]
    %v859 = vld [vmem:[%s5] sm:$0x1]
    %v861 = vlaneseq
    %v862 = vshrl.u32 %v861, 7
    %v863 = vsub.s32 0, %v862
    %v864 = vrot.slane %v859, %v863
    %v874 = vcombine.low %v847, %v848
    %v875 = vcombine.low %v849, %v850
    %v877 = vunpack.c.l.s4 1983009808
    %v878 = vunpack.c.0.s8 %v877
    %v879 = vlaneseq
    %v880 = vshrl.u32 %v879, 7
    %v881 = vsub.s32 %v878, %v880
    %v882 = vrot.slane %v874, %v881
    %v884 = vunpack.c.l.s4 1983009808
    %v885 = vunpack.c.0.s8 %v884
    %v886 = vlaneseq
    %v887 = vshrl.u32 %v886, 7
    %v888 = vsub.s32 %v885, %v887
    %v889 = vrot.slane %v875, %v888
    %v890 = vcombine.low %v882, %v889
    %v891 = vcombine.low %v851, %v852
    %v892 = vcombine.low %v853, %v854
    %v894 = vunpack.c.l.s4 1983009808
    %v895 = vunpack.c.0.s8 %v894
    %v896 = vlaneseq
    %v897 = vshrl.u32 %v896, 7
    %v898 = vsub.s32 %v895, %v897
    %v899 = vrot.slane %v891, %v898
    %v901 = vunpack.c.l.s4 1983009808
    %v902 = vunpack.c.0.s8 %v901
    %v903 = vlaneseq
    %v904 = vshrl.u32 %v903, 7
    %v905 = vsub.s32 %v902, %v904
    %v906 = vrot.slane %v892, %v905
    %v907 = vcombine.low %v899, %v906
    %v908 = vsel %vm224, %v890, 0
    %v910 = vsel %vm224, %v907, 0
    %912 = vmatprep.subr.mxu0 0.0
    %913 = vmatpush1.msra.mxu0 %v855
    %914 = vmatprep.subr.mxu0 0.0
    %915 = vmatpush1.msra.mxu0 %v856
    %916 = vmatprep.subr.mxu0 0.0
    %917 = vmatpush1.msra.mxu0 %v857
    %918 = vmatprep.subr.mxu0 0.0
    %919 = vmatpush1.msra.mxu0 %v858
    %920 = vmatprep.subr.mxu0 0.0
    %921 = vmatpush1.msra.mxu0 0.0
    %922 = vmatprep.subr.mxu0 0.0
    %923 = vmatpush1.msra.mxu0 0.0
    %924 = vmatprep.subr.mxu0 0.0
    %925 = vmatpush1.msra.mxu0 0.0
    %926 = vmatprep.subr.mxu0 0.0
    %927 = vmatpush1.msra.mxu0 0.0
    %928 = vmatprep.subr.mxu0 0.0
    %929 = vmatpush1.msra.mxu0 0.0
    %930 = vmatprep.subr.mxu0 0.0
    %931 = vmatpush1.msra.mxu0 0.0
    %932 = vmatprep.subr.mxu0 0.0
    %933 = vmatpush1.msra.mxu0 0.0
    %934 = vmatprep.subr.mxu0 0.0
    %935 = vmatpush1.msra.mxu0 0.0
    %936 = vmatprep.subr.mxu0 0.0
    %937 = vmatpush1.msra.mxu0 0.0
    %938 = vmatprep.subr.mxu0 0.0
    %939 = vmatpush1.msra.mxu0 0.0
    %940 = vmatprep.subr.mxu0 0.0
    %941 = vmatpush1.msra.mxu0 0.0
    %942 = vmatprep.subr.mxu0 0.0
    %943 = vmatpush1.msra.mxu0 0.0
    %944 = vmatprep.subr.mxu0 0.0
    %945 = vmatpush1.msra.mxu0 0.0
    %946 = vmatprep.subr.mxu0 0.0
    %947 = vmatpush1.msra.mxu0 0.0
    %948 = vmatprep.subr.mxu0 0.0
    %949 = vmatpush1.msra.mxu0 0.0
    %950 = vmatprep.subr.mxu0 0.0
    %951 = vmatpush1.msra.mxu0 0.0
    %952 = vmatprep.subr.mxu0 0.0
    %953 = vmatpush1.msra.mxu0 0.0
    %954 = vmatprep.subr.mxu0 0.0
    %955 = vmatpush1.msra.mxu0 0.0
    %956 = vmatprep.subr.mxu0 0.0
    %957 = vmatpush1.msra.mxu0 0.0
    %958 = vmatprep.subr.mxu0 0.0
    %959 = vmatpush1.msra.mxu0 0.0
    %960 = vmatprep.subr.mxu0 0.0
    %961 = vmatpush1.msra.mxu0 0.0
    %962 = vmatprep.subr.mxu0 0.0
    %963 = vmatpush1.msra.mxu0 0.0
    %964 = vmatprep.subr.mxu0 0.0
    %965 = vmatpush1.msra.mxu0 0.0
    %966 = vmatprep.subr.mxu0 0.0
    %967 = vmatpush1.msra.mxu0 0.0
    %968 = vmatprep.subr.mxu0 0.0
    %969 = vmatpush1.msra.mxu0 0.0
    %970 = vmatprep.subr.mxu0 0.0
    %971 = vmatpush1.msra.mxu0 0.0
    %972 = vmatprep.subr.mxu0 0.0
    %973 = vmatpush1.msra.mxu0 0.0
    %974 = vmatprep.subr.mxu0 0.0
    %975 = vmatpush1.msra.mxu0 0.0
    %976 = vmatprep.mubr.f32.mxu0 0.0
    %977 = vmatmul.mubr.f32.gmra.mrb[0].mxu0 %v908
    %v978 = vpop.f32.mrb[0].mxu0
    %v979 = vadd.f32 %v864, %v978
    %v980 = vpop.f32.mrb[0].mxu0
    %981 = vmatprep.mubr.f32.mxu0 0.0
    %982 = vmatmul.mubr.f32.gmra.mrb[0].mxu0 %v910
    %v983 = vpop.f32.mrb[0].mxu0
    %v984 = vadd.f32 %v864, %v983
    %v985 = vpop.f32.mrb[0].mxu0
    %986 = vdwg.mxu0
    %v989 = vcombine.high %v979, %v979
    %v991 = vunpack.c.l.s4 1983009808
    %v992 = vunpack.c.0.s8 %v991
    %v993 = vlaneseq
    %v994 = vshrl.u32 %v993, 7
    %v995 = vsub.s32 %v992, %v994
    %v996 = vrot.slane %v979, %v995
    %v998 = vunpack.c.l.s4 1983009808
    %v999 = vunpack.c.0.s8 %v998
    %v1000 = vlaneseq
    %v1001 = vshrl.u32 %v1000, 7
    %v1002 = vsub.s32 %v999, %v1001
    %v1003 = vrot.slane %v989, %v1002
    %v1004 = vcombine.high %v996, %v996
    %v1005 = vcombine.high %v1003, %v1003
    %v1006 = vcombine.high %v984, %v984
    %v1008 = vunpack.c.l.s4 1983009808
    %v1009 = vunpack.c.0.s8 %v1008
    %v1010 = vlaneseq
    %v1011 = vshrl.u32 %v1010, 7
    %v1012 = vsub.s32 %v1009, %v1011
    %v1013 = vrot.slane %v984, %v1012
    %v1015 = vunpack.c.l.s4 1983009808
    %v1016 = vunpack.c.0.s8 %v1015
    %v1017 = vlaneseq
    %v1018 = vshrl.u32 %v1017, 7
    %v1019 = vsub.s32 %v1016, %v1018
    %v1020 = vrot.slane %v1006, %v1019
    %v1021 = vcombine.high %v1013, %v1013
    %v1022 = vcombine.high %v1020, %v1020
    %vm1031 = vcmask 58368
    %1032 = vst.msk [vmem:[#allocation3] sm:$0x3] %vm1031, %v996
    %1033 = vst.msk [vmem:[#allocation3 + $0x2] sm:$0x3] %vm1031, %v1004
    %1034 = vst.msk [vmem:[#allocation3 + $0x4] sm:$0x3] %vm1031, %v1003
    %1035 = vst.msk [vmem:[#allocation3 + $0x6] sm:$0x3] %vm1031, %v1005
    %1036 = vst.msk [vmem:[#allocation3 + $0x8] sm:$0x3] %vm1031, %v1013
    %1037 = vst.msk [vmem:[#allocation3 + $0xa] sm:$0x3] %vm1031, %v1021
    %1038 = vst.msk [vmem:[#allocation3 + $0xc] sm:$0x3] %vm1031, %v1020
    %1039 = vst.msk [vmem:[#allocation3 + $0xe] sm:$0x3] %vm1031, %v1022
    // Predicated region
    $region26: #{tpu_custom_call.1} parent=1 // pred_check
      _
    $region27: #{tpu_custom_call.1} parent=1 // pred_check_branch
      %1041 = sbr.rel (0) target = $region29
    $region28: #{tpu_custom_call.1} parent=1 // pred_region
      %s1043 = ssub.s32 256, 256
      %1044 = vsyncadd [#allocation4], %s1043
      %s1045 = sshll.u32 [#allocation3], 4
      %s1046 = int_to_ptr.vmem [resolvable:$true] %s1045
      %1051 = dma.vmem_to_hbm [thread:$0]  %s1046, 256, %s6, [#allocation4], 32, 32, 2
    $region29: #{tpu_custom_call.1} parent=1 // pred_fallthru
      _
    // Predicated region
    $region30: #{tpu_custom_call.1} parent=1 // pred_check
      _
    $region31: #{tpu_custom_call.1} parent=1 // pred_check_branch
      %1053 = sbr.rel (0) target = $region33
    $region32: #{tpu_custom_call.1} parent=1 // pred_region
      %1054 = dma.done [#allocation4], 256
    $region33: #{tpu_custom_call.1} parent=1 // pred_fallthru
      _
    %1055 = vsyncpa [#allocation4], 1

</llo_original>
